<compile_context>
chip_gen: v5e
topology: v5e:2x2
jax: 0.10.0
libtpu: 0.0.40
codegen_flags: <defaults>
</compile_context>

<pallas_src>
import functools

import jax
import jax.numpy as jnp
from jax import lax
from jax.experimental import pallas as pl
from jax.experimental.pallas import tpu as pltpu


def routing_kernel(low_ref, seq_ref, par_ref, out_ref, *,
                   iteration, D_s, K, L, O):
    """low_ref: (B, L, D) f32; seq_ref: (B, 1) i32; par_ref: (D_s+K, max(O,L)) f32.

    par_ref rows [0:D_s, 0:O]   = S_matrix
    par_ref rows [D_s:D_s+K, 0:L] = B_matrix[0]
    out_ref: (B, K, O) f32 = high_capsule
    """
    Bsz = low_ref.shape[0]
    pad = jnp.float32(-2.0 ** 16 + 1.0)

    # ---- hoisted, iteration-invariant pieces -------------------------------
    # torch.einsum('ijk,lo->ijo', low, S) == low_sum[b,l] (outer) s_sum[o]
    low_sum = jnp.sum(low_ref[...], axis=-1)                      # (B, L)
    par = par_ref[...]                                            # (D_s+K, C)
    s_sum = jnp.sum(par[:D_s, :O], axis=0, keepdims=True)         # (1, O)
    b_mat = par[D_s:D_s + K, :L]                                  # (K, L)

    # sequence mask (identical across K) -> additive bias, computed once.
    pos = lax.broadcasted_iota(jnp.int32, (Bsz, 1, L), 2)         # (B, 1, L)
    valid = pos < seq_ref[...][:, :, None]                        # (B, 1, L) bool
    neg_bias = jnp.where(valid, jnp.float32(0.0), pad)            # (B, 1, L)

    high = jnp.zeros((Bsz, K, O), jnp.float32)
    for _ in range(iteration):
        # masked softmax over the sequence axis (L)
        logits = b_mat[None, :, :] + neg_bias                     # (B, K, L)
        m = jnp.max(logits, axis=-1, keepdims=True)
        e = jnp.exp(logits - m)
        W = e / jnp.sum(e, axis=-1, keepdims=True)                # (B, K, L)

        # high_capsule_tmp = W @ low_capsule_new  (rank-1 in the O axis)
        h = jnp.sum(W * low_sum[:, None, :], axis=-1)             # (B, K)
        high_tmp = h[:, :, None] * s_sum[None, :, :]              # (B, K, O)

        # squash: norm over dim=1 (the K axis), exactly as the torch source.
        sq = jnp.sum(high_tmp * high_tmp, axis=1, keepdims=True)  # (B, 1, O)
        scale = sq * lax.rsqrt(sq + 1e-9) * pl.reciprocal(1.0 + sq, approx=True)
        high = scale * high_tmp                                   # (B, K, O)

        # B_delta = sum_b  high @ low_capsule_new^T  (rank-1 again)
        hs = jnp.sum(high * s_sum[None, :, :], axis=-1)           # (B, K)
        b_mat = b_mat + jnp.sum(hs[:, :, None] * low_sum[:, None, :], axis=0)  # (K, L)

    out_ref[...] = high


def routing_forward(low_capsule, seq_len, S_matrix, B_matrix, *, iteration):
    """JAX wrapper matching Routing.forward(low_capsule, seq_len)."""
    Bsz, L, _ = low_capsule.shape
    K = B_matrix.shape[1]
    assert B_matrix.shape[2] == L
    D_s, O = S_matrix.shape

    # Pack the two small parameter tensors into ONE contiguous VMEM buffer.
    C = max(O, L)
    pbuf = jnp.zeros((D_s + K, C), jnp.float32)
    pbuf = pbuf.at[:D_s, :O].set(S_matrix.astype(jnp.float32))
    pbuf = pbuf.at[D_s:D_s + K, :L].set(B_matrix[0].astype(jnp.float32))

    seq_i32 = seq_len.astype(jnp.int32).reshape(Bsz, 1)

    kernel = functools.partial(routing_kernel, iteration=iteration,
                               D_s=D_s, K=K, L=L, O=O)
    vmem = pl.BlockSpec(memory_space=pltpu.MemorySpace.VMEM)

    return pl.pallas_call(
        kernel,
        out_shape=jax.ShapeDtypeStruct((Bsz, K, O), jnp.float32),
        in_specs=[vmem, vmem, vmem],
        out_specs=vmem,
    )(low_capsule.astype(jnp.float32), seq_i32, pbuf)


def routing_reference(low_capsule, seq_len, S_matrix, B_matrix, *, iteration):
    """Pure-JAX transliteration of the torch forward, for a sanity check."""
    Bsz, L, _ = low_capsule.shape
    K = B_matrix.shape[1]
    b_mat = B_matrix
    seq_tile = jnp.tile(seq_len, (1, K))                           # (B, K)
    row = jnp.arange(L)
    mask = row[None, None, :] < seq_tile[:, :, None]               # (B, K, L)
    pad = jnp.full((Bsz, K, L), -2.0 ** 16 + 1.0, jnp.float32)
    hi = jax.lax.Precision.HIGHEST
    high = None
    for _ in range(iteration):
        B_tile = jnp.broadcast_to(b_mat, (Bsz, K, L))
        B_mask = jnp.where(mask, B_tile, pad)
        W = jax.nn.softmax(B_mask, axis=-1)
        low_new = jnp.einsum('ijk,lo->ijo', low_capsule, S_matrix, precision=hi)
        high_tmp = jnp.einsum('bkl,blo->bko', W, low_new, precision=hi)
        sq = jnp.sum(jnp.square(high_tmp), axis=1, keepdims=True)
        scale = sq / (1.0 + sq) / jnp.sqrt(sq + 1e-9)
        high = scale * high_tmp
        delta = jnp.einsum('bko,blo->bkl', high, low_new, precision=hi)
        b_mat = b_mat + jnp.sum(delta, axis=0, keepdims=True)
    return high


if __name__ == "__main__":
    # Shapes implied by the module: small capsule routing problem.
    Bsz = 2
    max_len = 8          # L
    embed_size = 8       # low_capsule feature dim (summed by the einsum)
    input_units = 8      # S_matrix rows (summed by the einsum)
    output_units = 8     # O
    max_K = 4
    iteration = 2

    key = jax.random.PRNGKey(0)
    k1, k2, k3 = jax.random.split(key, 3)
    low_capsule = jax.random.normal(k1, (Bsz, max_len, embed_size), jnp.float32)
    S_matrix = jax.random.normal(k2, (input_units, output_units), jnp.float32)
    B_matrix = jax.random.normal(k3, (1, max_K, max_len), jnp.float32)
    seq_len = jnp.array([[5], [8]], dtype=jnp.int32)               # each <= max_len

    out = routing_forward(low_capsule, seq_len, S_matrix, B_matrix,
                          iteration=iteration)
    out = jax.block_until_ready(out)

    assert out.shape == (Bsz, max_K, output_units) and out.dtype == jnp.float32
    assert bool(jnp.all(jnp.isfinite(out)))

    # Loose tolerance: kernel uses EUP approx reciprocal / rsqrt in squash.
    ref = routing_reference(low_capsule, seq_len, S_matrix, B_matrix,
                            iteration=iteration)
    assert bool(jnp.allclose(out, ref, rtol=5e-2, atol=5e-2))

    print("KERNEL_OK")
</pallas_src>

<mosaic_0001>
module attributes {stable_mosaic.version = 11 : i64} {
  func.func @routing_kernel(%arg0: memref<2x8x8xf32, #tpu.memory_space<vmem>>, %arg1: memref<2x1xi32, #tpu.memory_space<vmem>>, %arg2: memref<12x8xf32, #tpu.memory_space<vmem>>, %arg3: memref<2x4x8xf32, #tpu.memory_space<vmem>>) attributes {dimension_semantics = [], scalar_prefetch = 0 : i64, scratch_operands = 0 : i64, tpu.core_type = #tpu.core_type<tc>} {
    %c0 = arith.constant 0 : index
    %c0_0 = arith.constant 0 : index
    %c0_1 = arith.constant 0 : index
    %0 = vector.load %arg0[%c0, %c0_0, %c0_1] : memref<2x8x8xf32, #tpu.memory_space<vmem>>, vector<2x8x8xf32>
    %cst = arith.constant dense<0.000000e+00> : vector<2x8xf32>
    %1 = vector.multi_reduction <add>, %0, %cst [2] : vector<2x8x8xf32> to vector<2x8xf32>
    %c0_2 = arith.constant 0 : index
    %c0_3 = arith.constant 0 : index
    %2 = vector.load %arg2[%c0_2, %c0_3] : memref<12x8xf32, #tpu.memory_space<vmem>>, vector<12x8xf32>
    %3 = vector.extract_strided_slice %2 {offsets = [0, 0], sizes = [8, 8], strides = [1, 1]} : vector<12x8xf32> to vector<8x8xf32>
    %cst_4 = arith.constant dense<0.000000e+00> : vector<8xf32>
    %4 = vector.multi_reduction <add>, %3, %cst_4 [0] : vector<8x8xf32> to vector<8xf32>
    %5 = vector.shape_cast %4 : vector<8xf32> to vector<1x8xf32>
    %6 = vector.extract_strided_slice %2 {offsets = [8, 0], sizes = [4, 8], strides = [1, 1]} : vector<12x8xf32> to vector<4x8xf32>
    %7 = tpu.iota {dimensions = array<i32: 2>} : vector<2x1x8xi32>
    %c0_5 = arith.constant 0 : index
    %c0_6 = arith.constant 0 : index
    %8 = vector.load %arg1[%c0_5, %c0_6] : memref<2x1xi32, #tpu.memory_space<vmem>>, vector<2x1xi32>
    %9 = vector.shape_cast %8 : vector<2x1xi32> to vector<2x1x1xi32>
    %10 = vector.broadcast %9 : vector<2x1x1xi32> to vector<2x1x8xi32>
    %11 = arith.cmpi slt, %7, %10 : vector<2x1x8xi32>
    %cst_7 = arith.constant 0.000000e+00 : f32
    %cst_8 = arith.constant -6.553500e+04 : f32
    %12 = vector.broadcast %cst_7 : f32 to vector<2x1x8xf32>
    %13 = vector.broadcast %cst_8 : f32 to vector<2x1x8xf32>
    %14 = arith.select %11, %12, %13 : vector<2x1x8xi1>, vector<2x1x8xf32>
    %15 = vector.shape_cast %6 : vector<4x8xf32> to vector<1x4x8xf32>
    %16 = vector.broadcast %15 : vector<1x4x8xf32> to vector<2x4x8xf32>
    %17 = vector.broadcast %14 : vector<2x1x8xf32> to vector<2x4x8xf32>
    %18 = arith.addf %16, %17 : vector<2x4x8xf32>
    %cst_9 = arith.constant dense<0xFF800000> : vector<2x4xf32>
    %19 = vector.multi_reduction <maximumf>, %18, %cst_9 [2] : vector<2x4x8xf32> to vector<2x4xf32>
    %20 = vector.shape_cast %19 : vector<2x4xf32> to vector<2x4x1xf32>
    %21 = vector.broadcast %20 : vector<2x4x1xf32> to vector<2x4x8xf32>
    %22 = arith.subf %18, %21 : vector<2x4x8xf32>
    %23 = math.exp %22 : vector<2x4x8xf32>
    %cst_10 = arith.constant dense<0.000000e+00> : vector<2x4xf32>
    %24 = vector.multi_reduction <add>, %23, %cst_10 [2] : vector<2x4x8xf32> to vector<2x4xf32>
    %25 = vector.shape_cast %24 : vector<2x4xf32> to vector<2x4x1xf32>
    %26 = vector.broadcast %25 : vector<2x4x1xf32> to vector<2x4x8xf32>
    %27 = arith.divf %23, %26 : vector<2x4x8xf32>
    %28 = vector.shape_cast %1 : vector<2x8xf32> to vector<2x1x8xf32>
    %29 = vector.broadcast %28 : vector<2x1x8xf32> to vector<2x4x8xf32>
    %30 = arith.mulf %27, %29 : vector<2x4x8xf32>
    %cst_11 = arith.constant dense<0.000000e+00> : vector<2x4xf32>
    %31 = vector.multi_reduction <add>, %30, %cst_11 [2] : vector<2x4x8xf32> to vector<2x4xf32>
    %32 = vector.shape_cast %31 : vector<2x4xf32> to vector<2x4x1xf32>
    %33 = vector.shape_cast %5 : vector<1x8xf32> to vector<1x1x8xf32>
    %34 = vector.broadcast %32 : vector<2x4x1xf32> to vector<2x4x8xf32>
    %35 = vector.broadcast %33 : vector<1x1x8xf32> to vector<2x4x8xf32>
    %36 = arith.mulf %34, %35 : vector<2x4x8xf32>
    %37 = arith.mulf %36, %36 : vector<2x4x8xf32>
    %cst_12 = arith.constant dense<0.000000e+00> : vector<2x8xf32>
    %38 = vector.multi_reduction <add>, %37, %cst_12 [1] : vector<2x4x8xf32> to vector<2x8xf32>
    %39 = vector.shape_cast %38 : vector<2x8xf32> to vector<2x1x8xf32>
    %cst_13 = arith.constant 9.99999971E-10 : f32
    %40 = vector.broadcast %cst_13 : f32 to vector<2x1x8xf32>
    %41 = arith.addf %39, %40 : vector<2x1x8xf32>
    %42 = math.rsqrt %41 : vector<2x1x8xf32>
    %43 = arith.mulf %39, %42 : vector<2x1x8xf32>
    %cst_14 = arith.constant 1.000000e+00 : f32
    %44 = vector.broadcast %cst_14 : f32 to vector<2x1x8xf32>
    %45 = arith.addf %44, %39 : vector<2x1x8xf32>
    %46 = tpu.reciprocal %45 {approx = true} : vector<2x1x8xf32> -> vector<2x1x8xf32>
    %47 = arith.mulf %43, %46 : vector<2x1x8xf32>
    %48 = vector.broadcast %47 : vector<2x1x8xf32> to vector<2x4x8xf32>
    %49 = arith.mulf %48, %36 : vector<2x4x8xf32>
    %50 = vector.shape_cast %5 : vector<1x8xf32> to vector<1x1x8xf32>
    %51 = vector.broadcast %50 : vector<1x1x8xf32> to vector<2x4x8xf32>
    %52 = arith.mulf %49, %51 : vector<2x4x8xf32>
    %cst_15 = arith.constant dense<0.000000e+00> : vector<2x4xf32>
    %53 = vector.multi_reduction <add>, %52, %cst_15 [2] : vector<2x4x8xf32> to vector<2x4xf32>
    %54 = vector.shape_cast %53 : vector<2x4xf32> to vector<2x4x1xf32>
    %55 = vector.shape_cast %1 : vector<2x8xf32> to vector<2x1x8xf32>
    %56 = vector.broadcast %54 : vector<2x4x1xf32> to vector<2x4x8xf32>
    %57 = vector.broadcast %55 : vector<2x1x8xf32> to vector<2x4x8xf32>
    %58 = arith.mulf %56, %57 : vector<2x4x8xf32>
    %cst_16 = arith.constant dense<0.000000e+00> : vector<4x8xf32>
    %59 = vector.multi_reduction <add>, %58, %cst_16 [0] : vector<2x4x8xf32> to vector<4x8xf32>
    %60 = arith.addf %6, %59 : vector<4x8xf32>
    %61 = vector.shape_cast %60 : vector<4x8xf32> to vector<1x4x8xf32>
    %62 = vector.broadcast %61 : vector<1x4x8xf32> to vector<2x4x8xf32>
    %63 = vector.broadcast %14 : vector<2x1x8xf32> to vector<2x4x8xf32>
    %64 = arith.addf %62, %63 : vector<2x4x8xf32>
    %cst_17 = arith.constant dense<0xFF800000> : vector<2x4xf32>
    %65 = vector.multi_reduction <maximumf>, %64, %cst_17 [2] : vector<2x4x8xf32> to vector<2x4xf32>
    %66 = vector.shape_cast %65 : vector<2x4xf32> to vector<2x4x1xf32>
    %67 = vector.broadcast %66 : vector<2x4x1xf32> to vector<2x4x8xf32>
    %68 = arith.subf %64, %67 : vector<2x4x8xf32>
    %69 = math.exp %68 : vector<2x4x8xf32>
    %cst_18 = arith.constant dense<0.000000e+00> : vector<2x4xf32>
    %70 = vector.multi_reduction <add>, %69, %cst_18 [2] : vector<2x4x8xf32> to vector<2x4xf32>
    %71 = vector.shape_cast %70 : vector<2x4xf32> to vector<2x4x1xf32>
    %72 = vector.broadcast %71 : vector<2x4x1xf32> to vector<2x4x8xf32>
    %73 = arith.divf %69, %72 : vector<2x4x8xf32>
    %74 = vector.shape_cast %1 : vector<2x8xf32> to vector<2x1x8xf32>
    %75 = vector.broadcast %74 : vector<2x1x8xf32> to vector<2x4x8xf32>
    %76 = arith.mulf %73, %75 : vector<2x4x8xf32>
    %cst_19 = arith.constant dense<0.000000e+00> : vector<2x4xf32>
    %77 = vector.multi_reduction <add>, %76, %cst_19 [2] : vector<2x4x8xf32> to vector<2x4xf32>
    %78 = vector.shape_cast %77 : vector<2x4xf32> to vector<2x4x1xf32>
    %79 = vector.shape_cast %5 : vector<1x8xf32> to vector<1x1x8xf32>
    %80 = vector.broadcast %78 : vector<2x4x1xf32> to vector<2x4x8xf32>
    %81 = vector.broadcast %79 : vector<1x1x8xf32> to vector<2x4x8xf32>
    %82 = arith.mulf %80, %81 : vector<2x4x8xf32>
    %83 = arith.mulf %82, %82 : vector<2x4x8xf32>
    %cst_20 = arith.constant dense<0.000000e+00> : vector<2x8xf32>
    %84 = vector.multi_reduction <add>, %83, %cst_20 [1] : vector<2x4x8xf32> to vector<2x8xf32>
    %85 = vector.shape_cast %84 : vector<2x8xf32> to vector<2x1x8xf32>
    %cst_21 = arith.constant 9.99999971E-10 : f32
    %86 = vector.broadcast %cst_21 : f32 to vector<2x1x8xf32>
    %87 = arith.addf %85, %86 : vector<2x1x8xf32>
    %88 = math.rsqrt %87 : vector<2x1x8xf32>
    %89 = arith.mulf %85, %88 : vector<2x1x8xf32>
    %cst_22 = arith.constant 1.000000e+00 : f32
    %90 = vector.broadcast %cst_22 : f32 to vector<2x1x8xf32>
    %91 = arith.addf %90, %85 : vector<2x1x8xf32>
    %92 = tpu.reciprocal %91 {approx = true} : vector<2x1x8xf32> -> vector<2x1x8xf32>
    %93 = arith.mulf %89, %92 : vector<2x1x8xf32>
    %94 = vector.broadcast %93 : vector<2x1x8xf32> to vector<2x4x8xf32>
    %95 = arith.mulf %94, %82 : vector<2x4x8xf32>
    %c0_23 = arith.constant 0 : index
    %c0_24 = arith.constant 0 : index
    %c0_25 = arith.constant 0 : index
    %96 = vector.load %arg3[%c0_23, %c0_24, %c0_25] : memref<2x4x8xf32, #tpu.memory_space<vmem>>, vector<2x4x8xf32>
    tpu.vector_store %arg3[%c0_23, %c0_24, %c0_25], %95 {strides = array<i32>} : memref<2x4x8xf32, #tpu.memory_space<vmem>>, vector<2x4x8xf32>,
    return
  }
}

</mosaic_0001>

<llo_original>
// kernel: tpu_custom_call.1
$region0: #{tpu_custom_call.1}
  #allocation0 [shape = 'u32[]', space=smem, size = 0x4, offset = 0x4, fixed_abs, tag = 'smem constant byte address 0x4 - core index']
  #allocation1 [shape = 'u32[72,128]{1,0:T(1,128)}', space=vmem, size = 0x9000, scoped, tag = 'internal scratch']
  %s0 = inlined_call_operand.vmem [shape: f32[2,8,8], index: 0, kind: input, shape index: {}]
  %s1 = inlined_call_operand.vmem [shape: s32[2,1], index: 1, kind: input, shape index: {}]
  %s2 = inlined_call_operand.vmem [shape: f32[12,8], index: 2, kind: input, shape index: {}]
  %s3 = inlined_call_operand.hbm [shape: f32[2,4,8], index: 3, kind: output, shape index: {}]
  %s4 = sld [smem:[#allocation0]]
  $region22: #{tpu_custom_call.1} parent=0
    _
  %s6 = ssub.s32 1, %s4
  %s7 = scalar_select 0, %s6, %s4
  $region1: #{tpu_custom_call.1} parent=0
    #allocation2 [shape = 'u8[4096]{0}', space=vmem, size = 0x1000, scoped, tag = 'output window, operand 0, single buffered']
    #allocation3 [shape = 's32[1]{0}', space=sflag, size = 0x4, scoped, tag = 'scoped memory for tpu_custom_call.1']
    %8 = vsyncpa [#allocation3], 0
    // Predicated region
    $region2: #{tpu_custom_call.1} parent=1 // pred_check
      _
    $region3: #{tpu_custom_call.1} parent=1 // pred_check_branch
      %10 = sbr.rel (0) target = $region5
    $region4: #{tpu_custom_call.1} parent=1 // pred_region
      _
    $region5: #{tpu_custom_call.1} parent=1 // pred_fallthru
      _
    // Predicated region
    $region6: #{tpu_custom_call.1} parent=1 // pred_check
      _
    $region7: #{tpu_custom_call.1} parent=1 // pred_check_branch
      %12 = sbr.rel (0) target = $region9
    $region8: #{tpu_custom_call.1} parent=1 // pred_region
      _
    $region9: #{tpu_custom_call.1} parent=1 // pred_fallthru
      _
    // Predicated region
    $region10: #{tpu_custom_call.1} parent=1 // pred_check
      _
    $region11: #{tpu_custom_call.1} parent=1 // pred_check_branch
      %14 = sbr.rel (0) target = $region13
    $region12: #{tpu_custom_call.1} parent=1 // pred_region
      _
    $region13: #{tpu_custom_call.1} parent=1 // pred_fallthru
      _
    %v15 = vld [vmem:[%s0] sm:$0xff]
    %v16 = vld [vmem:[%s0 + $0x8] sm:$0xff]
    %vm17 = vcmask 64512
    %v18 = vsel %vm17, %v15, 0.0
    %19 = vadd.xlane.f32.xlu0 %v18
    %v20 = vpop.xlane.xlu0 %19
    %v21 = vsel %vm17, %v16, 0.0
    %22 = vadd.xlane.f32.xlu0 %v21
    %v23 = vpop.xlane.xlu0 %22
    %v24 = vld [vmem:[%s2] sm:$0xff]
    %v25 = vld [vmem:[%s2 + $0x8] sm:$0xf]
    %v26 = vsel %vm17, %v24, 0.0
    %v27 = vrot.slane %v26, 4
    %v28 = vadd.f32 %v26, %v27
    %v29 = vrot.slane %v28, 2
    %v30 = vadd.f32 %v28, %v29
    %v31 = vrot.slane %v30, 1
    %v32 = vadd.f32 %v30, %v31
    %v33 = vlaneseq
    %v34 = vand.u32 %v33, 127
    %v35 = vld [vmem:[%s1] sm:$0x3]
    %v36 = vrot.slane %v35, 1
    %37 = vset.pattern.permute.xlu0 0
    %38 = vperm.xlu0 %37, %v35
    %v39 = vpop.permute.xlu0 %38
    %v40 = vperm.slane %v39, 0
    %41 = vset.pattern.permute.xlu0 0
    %42 = vperm.xlu0 %41, %v36
    %v43 = vpop.permute.xlu0 %42
    %v44 = vperm.slane %v43, 0
    %vm45 = vcmp.lt.s32.totalorder %v34, %v40
    %vm46 = vcmp.lt.s32.totalorder %v34, %v44
    %v47 = vsel %vm45, 0.0, -65535.0
    %v48 = vsel %vm46, 0.0, -65535.0
    %v49 = vadd.f32 %v25, %v47
    %v50 = vadd.f32 %v25, %v48
    %vm51 = vcmask 60416
    %v52 = vsel %vm51, %v49, -inf
    %53 = vmax.xlane.f32.xlu0 %v52
    %v54 = vpop.xlane.xlu0 %53
    %v55 = vsel %vm51, %v50, -inf
    %56 = vmax.xlane.f32.xlu0 %v55
    %v57 = vpop.xlane.xlu0 %56
    %v58 = vsub.f32 %v49, %v54
    %v59 = vsub.f32 %v50, %v57
    %v60 = vmul.f32 %v58, 1.442695
    %v61 = vpow.pop %v60
    %v62 = vmul.f32 %v59, 1.442695
    %v63 = vpow.pop %v62
    %v64 = vsel %vm51, %v61, 0.0
    %65 = vadd.xlane.f32.xlu0 %v64
    %v66 = vpop.xlane.xlu0 %65
    %v67 = vsel %vm51, %v63, 0.0
    %68 = vadd.xlane.f32.xlu0 %v67
    %v69 = vpop.xlane.xlu0 %68
    %v70 = vrcp.pop %v66
    %v71 = vmul.f32 %v66, %v70
    %v72 = vsub.f32 1.0, %v71
    %v73 = vmul.f32 %v70, %v72
    %v74 = vadd.f32 %v70, %v73
    %vm75 = vweird.f32 %v66
    %vm76 = vweird.f32 %v70
    %vm77 = vmor %vm75, %vm76
    %v78 = vsel %vm77, %v70, %v74
    %v79 = vand.u32 2147483647, %v66
    %vm80 = vcmp.eq.f32.partialorder %v79, 8.507059e+37
    %v81 = vand.u32 %v66, 2147483648
    %v82 = vor.u32 1.1754944e-38, %v81
    %v83 = vsel %vm80, %v82, %v78
    %v84 = vmul.f32 %v61, %v83
    %v85 = vrcp.pop %v69
    %v86 = vmul.f32 %v69, %v85
    %v87 = vsub.f32 1.0, %v86
    %v88 = vmul.f32 %v85, %v87
    %v89 = vadd.f32 %v85, %v88
    %vm90 = vweird.f32 %v69
    %vm91 = vweird.f32 %v85
    %vm92 = vmor %vm90, %vm91
    %v93 = vsel %vm92, %v85, %v89
    %v94 = vand.u32 2147483647, %v69
    %vm95 = vcmp.eq.f32.partialorder %v94, 8.507059e+37
    %v96 = vand.u32 %v69, 2147483648
    %v97 = vor.u32 1.1754944e-38, %v96
    %v98 = vsel %vm95, %v97, %v93
    %v99 = vmul.f32 %v63, %v98
    %v102 = vperm.slane %v20, %v34
    %v103 = vperm.slane %v23, %v34
    %vm104 = vcmask 1042434
    %v105 = vsel %vm104, %v102, %v102
    %vm106 = vcmask 1043459
    %v107 = vsel %vm106, %v102, %v105
    %v108 = vsel %vm104, %v103, %v103
    %v109 = vsel %vm106, %v103, %v108
    %v112 = vmul.f32 %v84, %v107
    %v113 = vmul.f32 %v99, %v109
    %v114 = vsel %vm51, %v112, 0.0
    %115 = vadd.xlane.f32.xlu0 %v114
    %v116 = vpop.xlane.xlu0 %115
    %v117 = vsel %vm51, %v113, 0.0
    %118 = vadd.xlane.f32.xlu0 %v117
    %v119 = vpop.xlane.xlu0 %118
    %v120 = vmul.f32 %v116, %v32
    %v121 = vmul.f32 %v119, %v32
    %v122 = vmul.f32 %v120, %v120
    %v123 = vmul.f32 %v121, %v121
    %v124 = vsel %vm51, %v122, 0.0
    %v125 = vrot.slane %v124, 4
    %v126 = vadd.f32 %v124, %v125
    %v127 = vrot.slane %v126, 2
    %v128 = vadd.f32 %v126, %v127
    %v129 = vrot.slane %v128, 1
    %v130 = vadd.f32 %v128, %v129
    %v131 = vsel %vm51, %v123, 0.0
    %v132 = vrot.slane %v131, 4
    %v133 = vadd.f32 %v131, %v132
    %v134 = vrot.slane %v133, 2
    %v135 = vadd.f32 %v133, %v134
    %v136 = vrot.slane %v135, 1
    %v137 = vadd.f32 %v135, %v136
    %v138 = vadd.f32 %v130, 1e-09
    %v139 = vadd.f32 %v137, 1e-09
    %v140 = vrsqrt.pop %v138
    %v141 = vmul.f32 %v140, %v138
    %v142 = vmul.f32 %v141, %v140
    %v143 = vmul.f32 0.5, %v142
    %v144 = vsub.f32 1.5, %v143
    %v145 = vmul.f32 %v140, %v144
    %vm146 = vweird.f32 %v138
    %vm147 = vweird.f32 %v140
    %vm148 = vmor %vm146, %vm147
    %v149 = vsel %vm148, %v140, %v145
    %v150 = vrsqrt.pop %v139
    %v151 = vmul.f32 %v150, %v139
    %v152 = vmul.f32 %v151, %v150
    %v153 = vmul.f32 0.5, %v152
    %v154 = vsub.f32 1.5, %v153
    %v155 = vmul.f32 %v150, %v154
    %vm156 = vweird.f32 %v139
    %vm157 = vweird.f32 %v150
    %vm158 = vmor %vm156, %vm157
    %v159 = vsel %vm158, %v150, %v155
    %v160 = vmul.f32 %v130, %v149
    %v161 = vmul.f32 %v137, %v159
    %v162 = vadd.f32 %v130, 1.0
    %v163 = vadd.f32 %v137, 1.0
    %v164 = vrcp.pop %v162
    %v165 = vrcp.pop %v163
    %v166 = vmul.f32 %v160, %v164
    %v167 = vmul.f32 %v161, %v165
    %v168 = vmul.f32 %v166, %v120
    %v169 = vmul.f32 %v167, %v121
    %v170 = vmul.f32 %v168, %v32
    %v171 = vmul.f32 %v169, %v32
    %v172 = vsel %vm51, %v170, 0.0
    %173 = vadd.xlane.f32.xlu0 %v172
    %v174 = vpop.xlane.xlu0 %173
    %v175 = vsel %vm51, %v171, 0.0
    %176 = vadd.xlane.f32.xlu0 %v175
    %v177 = vpop.xlane.xlu0 %176
    %v178 = vmul.f32 %v174, %v107
    %v179 = vmul.f32 %v177, %v109
    %v180 = vsel %vm51, %v178, 0.0
    %v181 = vsel %vm51, %v179, 0.0
    %v182 = vadd.f32 %v180, %v181
    %v183 = vadd.f32 %v25, %v182
    %v184 = vadd.f32 %v183, %v47
    %v185 = vadd.f32 %v183, %v48
    %v186 = vsel %vm51, %v184, -inf
    %187 = vmax.xlane.f32.xlu0 %v186
    %v188 = vpop.xlane.xlu0 %187
    %v189 = vsel %vm51, %v185, -inf
    %190 = vmax.xlane.f32.xlu0 %v189
    %v191 = vpop.xlane.xlu0 %190
    %v192 = vsub.f32 %v184, %v188
    %v193 = vsub.f32 %v185, %v191
    %v194 = vmul.f32 %v192, 1.442695
    %v195 = vpow.pop %v194
    %v196 = vmul.f32 %v193, 1.442695
    %v197 = vpow.pop %v196
    %v198 = vsel %vm51, %v195, 0.0
    %199 = vadd.xlane.f32.xlu0 %v198
    %v200 = vpop.xlane.xlu0 %199
    %v201 = vsel %vm51, %v197, 0.0
    %202 = vadd.xlane.f32.xlu0 %v201
    %v203 = vpop.xlane.xlu0 %202
    %v204 = vrcp.pop %v200
    %v205 = vmul.f32 %v200, %v204
    %v206 = vsub.f32 1.0, %v205
    %v207 = vmul.f32 %v204, %v206
    %v208 = vadd.f32 %v204, %v207
    %vm209 = vweird.f32 %v200
    %vm210 = vweird.f32 %v204
    %vm211 = vmor %vm209, %vm210
    %v212 = vsel %vm211, %v204, %v208
    %v213 = vand.u32 2147483647, %v200
    %vm214 = vcmp.eq.f32.partialorder %v213, 8.507059e+37
    %v215 = vand.u32 %v200, 2147483648
    %v216 = vor.u32 1.1754944e-38, %v215
    %v217 = vsel %vm214, %v216, %v212
    %v218 = vmul.f32 %v195, %v217
    %v219 = vrcp.pop %v203
    %v220 = vmul.f32 %v203, %v219
    %v221 = vsub.f32 1.0, %v220
    %v222 = vmul.f32 %v219, %v221
    %v223 = vadd.f32 %v219, %v222
    %vm224 = vweird.f32 %v203
    %vm225 = vweird.f32 %v219
    %vm226 = vmor %vm224, %vm225
    %v227 = vsel %vm226, %v219, %v223
    %v228 = vand.u32 2147483647, %v203
    %vm229 = vcmp.eq.f32.partialorder %v228, 8.507059e+37
    %v230 = vand.u32 %v203, 2147483648
    %v231 = vor.u32 1.1754944e-38, %v230
    %v232 = vsel %vm229, %v231, %v227
    %v233 = vmul.f32 %v197, %v232
    %v234 = vmul.f32 %v218, %v107
    %v235 = vmul.f32 %v233, %v109
    %v236 = vsel %vm51, %v234, 0.0
    %237 = vadd.xlane.f32.xlu0 %v236
    %v238 = vpop.xlane.xlu0 %237
    %v239 = vsel %vm51, %v235, 0.0
    %240 = vadd.xlane.f32.xlu0 %v239
    %v241 = vpop.xlane.xlu0 %240
    %v242 = vmul.f32 %v238, %v32
    %v243 = vmul.f32 %v241, %v32
    %v244 = vmul.f32 %v242, %v242
    %v245 = vmul.f32 %v243, %v243
    %v246 = vsel %vm51, %v244, 0.0
    %v247 = vrot.slane %v246, 4
    %v248 = vadd.f32 %v246, %v247
    %v249 = vrot.slane %v248, 2
    %v250 = vadd.f32 %v248, %v249
    %v251 = vrot.slane %v250, 1
    %v252 = vadd.f32 %v250, %v251
    %v253 = vsel %vm51, %v245, 0.0
    %v254 = vrot.slane %v253, 4
    %v255 = vadd.f32 %v253, %v254
    %v256 = vrot.slane %v255, 2
    %v257 = vadd.f32 %v255, %v256
    %v258 = vrot.slane %v257, 1
    %v259 = vadd.f32 %v257, %v258
    %v260 = vadd.f32 %v252, 1e-09
    %v261 = vadd.f32 %v259, 1e-09
    %v262 = vrsqrt.pop %v260
    %v263 = vmul.f32 %v262, %v260
    %v264 = vmul.f32 %v263, %v262
    %v265 = vmul.f32 0.5, %v264
    %v266 = vsub.f32 1.5, %v265
    %v267 = vmul.f32 %v262, %v266
    %vm268 = vweird.f32 %v260
    %vm269 = vweird.f32 %v262
    %vm270 = vmor %vm268, %vm269
    %v271 = vsel %vm270, %v262, %v267
    %v272 = vrsqrt.pop %v261
    %v273 = vmul.f32 %v272, %v261
    %v274 = vmul.f32 %v273, %v272
    %v275 = vmul.f32 0.5, %v274
    %v276 = vsub.f32 1.5, %v275
    %v277 = vmul.f32 %v272, %v276
    %vm278 = vweird.f32 %v261
    %vm279 = vweird.f32 %v272
    %vm280 = vmor %vm278, %vm279
    %v281 = vsel %vm280, %v272, %v277
    %v282 = vmul.f32 %v252, %v271
    %v283 = vmul.f32 %v259, %v281
    %v284 = vadd.f32 %v252, 1.0
    %v285 = vadd.f32 %v259, 1.0
    %v286 = vrcp.pop %v284
    %v287 = vrcp.pop %v285
    %v288 = vmul.f32 %v282, %v286
    %v289 = vmul.f32 %v283, %v287
    %v290 = vmul.f32 %v288, %v242
    %v291 = vmul.f32 %v289, %v243
    %292 = vst.msk [vmem:[#allocation2] sm:$0xf] %vm51, %v290
    %293 = vst.msk [vmem:[#allocation2 + $0x4] sm:$0xf] %vm51, %v291
    // Predicated region
    $region14: #{tpu_custom_call.1} parent=1 // pred_check
      _
    $region15: #{tpu_custom_call.1} parent=1 // pred_check_branch
      %295 = sbr.rel (0) target = $region17
    $region16: #{tpu_custom_call.1} parent=1 // pred_region
      %297 = vsyncadd [#allocation3], 0
      %s298 = sshll.u32 [#allocation2], 4
      %s299 = int_to_ptr.vmem [resolvable:$true] %s298
      %s300 = sshll.u32 %s3, 4
      %s301 = int_to_ptr.hbm [resolvable:$true] %s300
      %306 = dma.vmem_to_hbm [thread:$0]  %s299, 128, %s301, [#allocation3], 64, 64, 4
    $region17: #{tpu_custom_call.1} parent=1 // pred_fallthru
      _
    // Predicated region
    $region18: #{tpu_custom_call.1} parent=1 // pred_check
      _
    $region19: #{tpu_custom_call.1} parent=1 // pred_check_branch
      %308 = sbr.rel (0) target = $region21
    $region20: #{tpu_custom_call.1} parent=1 // pred_region
      %310 = dma.done [#allocation3], 128
    $region21: #{tpu_custom_call.1} parent=1 // pred_fallthru
      _
    %311 = vsyncpa [#allocation3], 1

</llo_original>
